<compile_context>
chip_gen: v7x
topology: tpu7x:2x2x1
jax: 0.10.0
libtpu: 0.0.40
codegen_flags: <defaults>
</compile_context>

<pallas_src>
import functools

import jax
import jax.numpy as jnp
from jax.experimental import pallas as pl
from jax.experimental.pallas import tpu as pltpu

_LANE = 128


def _round_up(n, m=_LANE):
    return ((n + m - 1) // m) * m


def _pad_to(x, shape):
    return jnp.pad(x, [(0, t - s) for s, t in zip(x.shape, shape)])


def _vmem():
    return pl.BlockSpec(memory_space=pltpu.MemorySpace.VMEM)


def _smem():
    return pl.BlockSpec(memory_space=pltpu.MemorySpace.SMEM)


# ------------- text branch: projection + GCN + residual + L2-norm -----------
# Image-independent; computed ONCE per parameter set, in transposed layout
# [Fpad, Cpad], with logit_scale.exp() folded in, output cached in bf16.
# (Off the per-image critical path -> not tuned further; f32 matmuls are fine.)
def text_gcn_kernel(promptT_ref, w_textT_ref, adjT_ref, w1T_ref, w2T_ref,
                    scale_ref, txtT_out_ref):
    # txt.T = (prompt_pooled @ w_text).T = w_text.T @ prompt_pooled.T
    txtT = jnp.dot(w_textT_ref[...], promptT_ref[...],
                   preferred_element_type=jnp.float32)                 # [Fpad, Cpad]
    identityT = txtT
    # GCN_feature: relu(A @ X @ W1); A @ H @ W2   (all in transposed form)
    h = jnp.dot(txtT, adjT_ref[...], preferred_element_type=jnp.float32)
    h = jnp.maximum(
        jnp.dot(w1T_ref[...], h, preferred_element_type=jnp.float32), 0.0)
    h = jnp.dot(h, adjT_ref[...], preferred_element_type=jnp.float32)
    h = jnp.dot(w2T_ref[...], h, preferred_element_type=jnp.float32)   # [Fpad, Cpad]
    txtT = h + identityT                                               # residual add
    # per-class L2 norm; padded classes have sumsq == 0 -> stay exactly 0
    sumsq = jnp.sum(txtT * txtT, axis=0, keepdims=True)                # [1, Cpad]
    txt_n = txtT * jax.lax.rsqrt(jnp.maximum(sumsq, 1e-30))
    # fold logit_scale.exp() once; cache in bf16 for the per-image MXU matmul
    txtT_out_ref[...] = (txt_n * scale_ref[0]).astype(txtT_out_ref.dtype)


# -------- fused per-image kernel: pool -> fused embed/proj -> norm -> logits --
def fused_image_kernel(patches_ref, w_fused_ref, txt_scaled_T_ref,
                       logits_ref, imgn_ref, *, n_patches, inv_np):
    # mean-pool over patches BEFORE the matmul (trunk is linear); unrolled
    # contiguous-slab adds over the leading axis keep this on the VPU in f32.
    acc = patches_ref[0].astype(jnp.float32)                           # [TB, Dpad]
    for j in range(1, n_patches):
        acc = acc + patches_ref[j].astype(jnp.float32)
    pooled = (acc * inv_np).astype(jnp.bfloat16)                       # [TB, Dpad]
    # fused patch-embed + projection (w_patch @ w_proj precomputed), bf16 MXU
    # with f32 accumulation.
    img = jnp.dot(pooled, w_fused_ref[...],
                  preferred_element_type=jnp.float32)                  # [TB, Fpad]
    # image_features / image_features.norm(dim=-1, keepdim=True)  (f32 VPU)
    sumsq = jnp.sum(img * img, axis=-1, keepdims=True)
    img_n = img * jax.lax.rsqrt(jnp.maximum(sumsq, 1e-30))
    imgn_ref[...] = img_n                                              # [TB, Fpad] lane-dense
    # logits = (scale folded into text) * img_n @ txt_n.T ; text side already
    # transposed, normalized and scaled -> plain NN bf16 matmul.
    logits_ref[...] = jnp.dot(img_n.astype(jnp.bfloat16), txt_scaled_T_ref[...],
                              preferred_element_type=jnp.float32)      # [TB, Cpad]


# ------------------------------ wrappers -------------------------------------
def precompute_text_state(params):
    """Image-independent work: pad/transpose params, run text/GCN kernel once,
    fold logit_scale, pre-fuse the linear image-trunk weights. Cached."""
    prompt_emb = params["prompt_emb"]            # [C, n_ctx, embed_dim]
    w_text = params["w_text"]                    # [embed_dim, feat_dim]
    adj = params["gcn_relation"]                 # [C, C]
    w_gcn1, w_gcn2 = params["w_gcn1"], params["w_gcn2"]
    w_patch, w_proj = params["w_patch"], params["w_proj"]

    C, _, embed_dim = prompt_emb.shape
    feat_dim = w_text.shape[1]
    Dp = w_patch.shape[0]
    mid = w_gcn1.shape[1]
    Cpad, Fpad, Dpad = _round_up(C), _round_up(feat_dim), _round_up(Dp)

    scale = jnp.exp(params["logit_scale"]).reshape(1).astype(jnp.float32)

    prompt_pooled = jnp.mean(prompt_emb, axis=1)                       # [C, embed_dim]
    promptT = _pad_to(prompt_pooled.T, (embed_dim, Cpad))
    w_textT = _pad_to(w_text.T, (Fpad, embed_dim))
    adjT = _pad_to(adj.T, (Cpad, Cpad))
    w1T = _pad_to(w_gcn1.T, (mid, Fpad))
    w2T = _pad_to(w_gcn2.T, (Fpad, mid))

    txt_scaled_T = pl.pallas_call(
        text_gcn_kernel,
        out_shape=jax.ShapeDtypeStruct((Fpad, Cpad), jnp.bfloat16),
        in_specs=[_vmem()] * 5 + [_smem()],
        out_specs=_vmem(),
    )(promptT, w_textT, adjT, w1T, w2T, scale)

    # Linear trunk: fuse patch-embed and projection into one bf16 weight.
    # TODO(synk): revert this fusion when the real (nonlinear) ViT is inserted.
    w_fused = _pad_to(
        jnp.dot(w_patch.astype(jnp.float32), w_proj.astype(jnp.float32)),
        (Dpad, Fpad)).astype(jnp.bfloat16)                             # [Dpad, Fpad]

    return dict(
        txt_scaled_T=txt_scaled_T,
        w_fused=w_fused,
        scale=scale,
        num_classes=C, feat_dim=feat_dim,
        Cpad=Cpad, Fpad=Fpad, Dpad=Dpad,
        patch=params["patch"],
    )


def peft_model_forward(image, params, text_state=None):
    if text_state is None:                      # cacheable: image-independent
        text_state = precompute_text_state(params)

    B, Cin, H, W = image.shape
    P = text_state["patch"]
    Hp, Wp = H // P, W // P
    Np = Hp * Wp
    Dp = Cin * P * P
    Dpad, Fpad, Cpad = text_state["Dpad"], text_state["Fpad"], text_state["Cpad"]

    # Row (batch) tiling: at least 8 sublanes, at most 128 MXU rows per tile.
    TILE_B = min(128, max(8, _round_up(B, 8)))
    Bpad = _round_up(B, TILE_B)

    # im2col for the non-overlapping patch-embed conv, laid out [Np, B, Dp] so
    # every per-patch slab is a contiguous 2-D tile; emitted in bf16.
    # (real CLIP conv weights would be reshaped as conv_w.reshape(width, Cin*P*P).T)
    # TODO(synk): at real CLIP sizes do this gather in-kernel via a grid over
    #             the NCHW image instead of a wrapper-side im2col round-trip.
    patches = image.reshape(B, Cin, Hp, P, Wp, P)
    patches = jnp.transpose(patches, (2, 4, 0, 1, 3, 5)).reshape(Np, B, Dp)
    patches = _pad_to(patches, (Np, Bpad, Dpad)).astype(jnp.bfloat16)

    kernel = functools.partial(fused_image_kernel, n_patches=Np, inv_np=1.0 / Np)
    logits_pad, imgn_pad = pl.pallas_call(
        kernel,
        out_shape=(jax.ShapeDtypeStruct((Bpad, Cpad), jnp.float32),
                   jax.ShapeDtypeStruct((Bpad, Fpad), jnp.float32)),
        grid=(Bpad // TILE_B,),
        in_specs=[
            # streamed row tiles of patches (double-buffered by BlockSpec)
            pl.BlockSpec((Np, TILE_B, Dpad), lambda i: (0, i, 0)),
            # resident weights: same block for every grid step
            pl.BlockSpec((Dpad, Fpad), lambda i: (0, 0)),
            pl.BlockSpec((Fpad, Cpad), lambda i: (0, 0)),
        ],
        out_specs=(pl.BlockSpec((TILE_B, Cpad), lambda i: (i, 0)),
                   pl.BlockSpec((TILE_B, Fpad), lambda i: (i, 0))),
        compiler_params=pltpu.CompilerParams(
            dimension_semantics=("parallel",),        # shards rows on v7x's 2 TCs
            vmem_limit_bytes=32 * 1024 * 1024),       # explicit budget (v7x: 64 MiB phys)
    )(patches, text_state["w_fused"], text_state["txt_scaled_T"])

    logits = logits_pad[:B, :text_state["num_classes"]]
    image_features = imgn_pad[:B, :text_state["feat_dim"]]
    logit_scale = text_state["scale"][0]
    return logits, image_features, logit_scale


if __name__ == "__main__":
    key = jax.random.PRNGKey(0)
    B, Cin, H, W = 2, 4, 16, 16
    P = 8
    Np = (H // P) * (W // P)          # 4
    Dp = Cin * P * P                  # 256
    width = 64
    feat_dim = 32
    num_classes = 8
    embed_dim = 48
    n_ctx = 4
    mid_features = 16

    ks = jax.random.split(key, 8)
    image = jax.random.normal(ks[0], (B, Cin, H, W), jnp.float32)

    params = dict(
        patch=P,
        w_patch=jax.random.normal(ks[1], (Dp, width), jnp.float32) * 0.02,
        w_proj=jax.random.normal(ks[2], (width, feat_dim), jnp.float32) * 0.02,
        prompt_emb=jax.random.normal(ks[3], (num_classes, n_ctx, embed_dim),
                                     jnp.float32) * 0.02,
        w_text=jax.random.normal(ks[4], (embed_dim, feat_dim), jnp.float32) * 0.02,
        w_gcn1=jax.random.normal(ks[5], (feat_dim, mid_features), jnp.float32) * 0.1,
        w_gcn2=jax.random.normal(ks[6], (mid_features, feat_dim), jnp.float32) * 0.1,
        logit_scale=jnp.float32(jnp.log(1.0 / 0.07)),                  # CLIP init
    )
    # gcn_relation: row-normalized adjacency with self-loops
    adj = jnp.eye(num_classes, dtype=jnp.float32) + 0.1
    params["gcn_relation"] = adj / jnp.sum(adj, axis=-1, keepdims=True)

    # Image-independent text branch + fused trunk weight computed once, cached.
    text_state = jax.tree.map(jax.block_until_ready, precompute_text_state(params))

    logits, image_features, logit_scale = peft_model_forward(
        image, params, text_state)
    jax.block_until_ready((logits, image_features, logit_scale))

    assert logits.shape == (B, num_classes)
    assert image_features.shape == (B, feat_dim)
    assert bool(jnp.all(jnp.isfinite(logits)))
    assert bool(jnp.all(jnp.isfinite(image_features)))
    print("KERNEL_OK")
</pallas_src>

<mosaic_0001>
module attributes {stable_mosaic.version = 11 : i64} {
  func.func @text_gcn_kernel(%arg0: memref<48x128xf32, #tpu.memory_space<vmem>>, %arg1: memref<128x48xf32, #tpu.memory_space<vmem>>, %arg2: memref<128x128xf32, #tpu.memory_space<vmem>>, %arg3: memref<16x128xf32, #tpu.memory_space<vmem>>, %arg4: memref<128x16xf32, #tpu.memory_space<vmem>>, %arg5: memref<1xf32, #tpu.memory_space<smem>>, %arg6: memref<128x128xbf16, #tpu.memory_space<vmem>>) attributes {dimension_semantics = [], scalar_prefetch = 0 : i64, scratch_operands = 0 : i64, tpu.core_type = #tpu.core_type<tc>} {
    %c0 = arith.constant 0 : index
    %c0_0 = arith.constant 0 : index
    %0 = vector.load %arg1[%c0, %c0_0] : memref<128x48xf32, #tpu.memory_space<vmem>>, vector<128x48xf32>
    %c0_1 = arith.constant 0 : index
    %c0_2 = arith.constant 0 : index
    %1 = vector.load %arg0[%c0_1, %c0_2] : memref<48x128xf32, #tpu.memory_space<vmem>>, vector<48x128xf32>
    %cst = arith.constant dense<0.000000e+00> : vector<128x128xf32>
    %2 = tpu.matmul %0, %1, %cst {dimension_numbers = #tpu.dot_dimension_numbers<[1], [0], [0], [1], [0, 0, 1, 1], [], []>} : vector<128x48xf32>, vector<48x128xf32>, vector<128x128xf32> -> vector<128x128xf32>
    %c0_3 = arith.constant 0 : index
    %c0_4 = arith.constant 0 : index
    %3 = vector.load %arg2[%c0_3, %c0_4] : memref<128x128xf32, #tpu.memory_space<vmem>>, vector<128x128xf32>
    %cst_5 = arith.constant dense<0.000000e+00> : vector<128x128xf32>
    %4 = tpu.matmul %2, %3, %cst_5 {dimension_numbers = #tpu.dot_dimension_numbers<[1], [0], [0], [1], [0, 0, 1, 1], [], []>} : vector<128x128xf32>, vector<128x128xf32>, vector<128x128xf32> -> vector<128x128xf32>
    %c0_6 = arith.constant 0 : index
    %c0_7 = arith.constant 0 : index
    %5 = vector.load %arg3[%c0_6, %c0_7] : memref<16x128xf32, #tpu.memory_space<vmem>>, vector<16x128xf32>
    %cst_8 = arith.constant dense<0.000000e+00> : vector<16x128xf32>
    %6 = tpu.matmul %5, %4, %cst_8 {dimension_numbers = #tpu.dot_dimension_numbers<[1], [0], [0], [1], [0, 0, 1, 1], [], []>} : vector<16x128xf32>, vector<128x128xf32>, vector<16x128xf32> -> vector<16x128xf32>
    %cst_9 = arith.constant 0.000000e+00 : f32
    %7 = vector.broadcast %cst_9 : f32 to vector<16x128xf32>
    %8 = arith.maximumf %6, %7 : vector<16x128xf32>
    %c0_10 = arith.constant 0 : index
    %c0_11 = arith.constant 0 : index
    %9 = vector.load %arg2[%c0_10, %c0_11] : memref<128x128xf32, #tpu.memory_space<vmem>>, vector<128x128xf32>
    %cst_12 = arith.constant dense<0.000000e+00> : vector<16x128xf32>
    %10 = tpu.matmul %8, %9, %cst_12 {dimension_numbers = #tpu.dot_dimension_numbers<[1], [0], [0], [1], [0, 0, 1, 1], [], []>} : vector<16x128xf32>, vector<128x128xf32>, vector<16x128xf32> -> vector<16x128xf32>
    %c0_13 = arith.constant 0 : index
    %c0_14 = arith.constant 0 : index
    %11 = vector.load %arg4[%c0_13, %c0_14] : memref<128x16xf32, #tpu.memory_space<vmem>>, vector<128x16xf32>
    %cst_15 = arith.constant dense<0.000000e+00> : vector<128x128xf32>
    %12 = tpu.matmul %11, %10, %cst_15 {dimension_numbers = #tpu.dot_dimension_numbers<[1], [0], [0], [1], [0, 0, 1, 1], [], []>} : vector<128x16xf32>, vector<16x128xf32>, vector<128x128xf32> -> vector<128x128xf32>
    %13 = arith.addf %12, %2 : vector<128x128xf32>
    %14 = arith.mulf %13, %13 : vector<128x128xf32>
    %cst_16 = arith.constant dense<0.000000e+00> : vector<128xf32>
    %15 = vector.multi_reduction <add>, %14, %cst_16 [0] : vector<128x128xf32> to vector<128xf32>
    %16 = vector.shape_cast %15 : vector<128xf32> to vector<1x128xf32>
    %cst_17 = arith.constant 1.000000e-30 : f32
    %17 = vector.broadcast %cst_17 : f32 to vector<1x128xf32>
    %18 = arith.maximumf %16, %17 : vector<1x128xf32>
    %19 = math.rsqrt %18 : vector<1x128xf32>
    %20 = vector.broadcast %19 : vector<1x128xf32> to vector<128x128xf32>
    %21 = arith.mulf %13, %20 : vector<128x128xf32>
    %c0_18 = arith.constant 0 : index
    %22 = memref.load %arg5[%c0_18] : memref<1xf32, #tpu.memory_space<smem>>
    %23 = vector.broadcast %22 : f32 to vector<128x128xf32>
    %24 = arith.mulf %21, %23 : vector<128x128xf32>
    %25 = arith.truncf %24 : vector<128x128xf32> to vector<128x128xbf16>
    %c0_19 = arith.constant 0 : index
    %c0_20 = arith.constant 0 : index
    %26 = vector.load %arg6[%c0_19, %c0_20] : memref<128x128xbf16, #tpu.memory_space<vmem>>, vector<128x128xbf16>
    tpu.vector_store %arg6[%c0_19, %c0_20], %25 {strides = array<i32>} : memref<128x128xbf16, #tpu.memory_space<vmem>>, vector<128x128xbf16>,
    return
  }
}

</mosaic_0001>

<llo_original>
// kernel: tpu_custom_call.1
$region0: #{tpu_custom_call.1}
  #allocation0 [shape = 'u32[]', space=smem, size = 0x4, offset = 0x4, fixed_abs, tag = 'smem constant byte address 0x4 - core index']
  #allocation1 [shape = 'u32[144,128]{1,0:T(1,128)}', space=vmem, size = 0x12000, scoped, tag = 'internal scratch']
  #allocation2 [shape = 'f32[1]{0:T(128)S(6)}', space=smem, size = 0x200, scoped, tag = 'scoped memory for tpu_custom_call.1']
  %s0 = inlined_call_operand.vmem [shape: f32[48,128], index: 0, kind: input, shape index: {}]
  %s1 = inlined_call_operand.vmem [shape: f32[128,48], index: 1, kind: input, shape index: {}]
  %s2 = inlined_call_operand.vmem [shape: f32[128,128], index: 2, kind: input, shape index: {}]
  %s3 = inlined_call_operand.vmem [shape: f32[16,128], index: 3, kind: input, shape index: {}]
  %s4 = inlined_call_operand.vmem [shape: f32[128,16], index: 4, kind: input, shape index: {}]
  %s5 = inlined_call_operand.<no memory space> [shape: f32[1], index: 5, kind: input, shape index: {}]
  %s6 = inlined_call_operand.hbm [shape: bf16[128,128], index: 6, kind: output, shape index: {}]
  %s7 = sld [smem:[#allocation0]]
  $region34: #{tpu_custom_call.1} parent=0
    _
  %s9 = ssub.s32 1, %s7
  %s10 = scalar_select 0, %s9, %s7
  %11 = sst [smem:[#allocation2]] %s5
  $region1: #{tpu_custom_call.1} parent=0
    #allocation3 [shape = 'u8[32768]{0}', space=vmem, size = 0x8000, scoped, tag = 'output window, operand 0, single buffered']
    #allocation4 [shape = 's32[1]{0}', space=sflag, size = 0x4, scoped, tag = 'scoped memory for tpu_custom_call.1']
    %12 = vsyncpa [#allocation4], 0
    // Predicated region
    $region2: #{tpu_custom_call.1} parent=1 // pred_check
      _
    $region3: #{tpu_custom_call.1} parent=1 // pred_check_branch
      %14 = sbr.rel (0) target = $region5
    $region4: #{tpu_custom_call.1} parent=1 // pred_region
      _
    $region5: #{tpu_custom_call.1} parent=1 // pred_fallthru
      _
    // Predicated region
    $region6: #{tpu_custom_call.1} parent=1 // pred_check
      _
    $region7: #{tpu_custom_call.1} parent=1 // pred_check_branch
      %16 = sbr.rel (0) target = $region9
    $region8: #{tpu_custom_call.1} parent=1 // pred_region
      _
    $region9: #{tpu_custom_call.1} parent=1 // pred_fallthru
      _
    // Predicated region
    $region10: #{tpu_custom_call.1} parent=1 // pred_check
      _
    $region11: #{tpu_custom_call.1} parent=1 // pred_check_branch
      %18 = sbr.rel (0) target = $region13
    $region12: #{tpu_custom_call.1} parent=1 // pred_region
      _
    $region13: #{tpu_custom_call.1} parent=1 // pred_fallthru
      _
    // Predicated region
    $region14: #{tpu_custom_call.1} parent=1 // pred_check
      _
    $region15: #{tpu_custom_call.1} parent=1 // pred_check_branch
      %20 = sbr.rel (0) target = $region17
    $region16: #{tpu_custom_call.1} parent=1 // pred_region
      _
    $region17: #{tpu_custom_call.1} parent=1 // pred_fallthru
      _
    // Predicated region
    $region18: #{tpu_custom_call.1} parent=1 // pred_check
      _
    $region19: #{tpu_custom_call.1} parent=1 // pred_check_branch
      %22 = sbr.rel (0) target = $region21
    $region20: #{tpu_custom_call.1} parent=1 // pred_region
      _
    $region21: #{tpu_custom_call.1} parent=1 // pred_fallthru
      _
    // Predicated region
    $region22: #{tpu_custom_call.1} parent=1 // pred_check
      _
    $region23: #{tpu_custom_call.1} parent=1 // pred_check_branch
      %24 = sbr.rel (0) target = $region25
    $region24: #{tpu_custom_call.1} parent=1 // pred_region
      _
    $region25: #{tpu_custom_call.1} parent=1 // pred_fallthru
      _
    %v25 = vld [vmem:[%s1] sm:$0xff]
    %v26 = vld [vmem:[%s1 + $0x8] sm:$0xff]
    %v27 = vld [vmem:[%s1 + $0x10] sm:$0xff]
    %v28 = vld [vmem:[%s1 + $0x18] sm:$0xff]
    %v29 = vld [vmem:[%s1 + $0x20] sm:$0xff]
    %v30 = vld [vmem:[%s1 + $0x28] sm:$0xff]
    %v31 = vld [vmem:[%s1 + $0x30] sm:$0xff]
    %v32 = vld [vmem:[%s1 + $0x38] sm:$0xff]
    %v33 = vld [vmem:[%s1 + $0x40] sm:$0xff]
    %v34 = vld [vmem:[%s1 + $0x48] sm:$0xff]
    %v35 = vld [vmem:[%s1 + $0x50] sm:$0xff]
    %v36 = vld [vmem:[%s1 + $0x58] sm:$0xff]
    %v37 = vld [vmem:[%s1 + $0x60] sm:$0xff]
    %v38 = vld [vmem:[%s1 + $0x68] sm:$0xff]
    %v39 = vld [vmem:[%s1 + $0x70] sm:$0xff]
    %v40 = vld [vmem:[%s1 + $0x78] sm:$0xff]
    %v41 = vld [vmem:[%s0] sm:$0xff]
    %v42 = vld [vmem:[%s0 + $0x8] sm:$0xff]
    %v43 = vld [vmem:[%s0 + $0x10] sm:$0xff]
    %v44 = vld [vmem:[%s0 + $0x18] sm:$0xff]
    %v45 = vld [vmem:[%s0 + $0x20] sm:$0xff]
    %v46 = vld [vmem:[%s0 + $0x28] sm:$0xff]
    %vm47 = vcmask 392192
    %v49 = vsel %vm47, %v25, 0
    %v52 = vsel %vm47, %v26, 0
    %v55 = vsel %vm47, %v27, 0
    %v58 = vsel %vm47, %v28, 0
    %v61 = vsel %vm47, %v29, 0
    %v64 = vsel %vm47, %v30, 0
    %v67 = vsel %vm47, %v31, 0
    %v70 = vsel %vm47, %v32, 0
    %v73 = vsel %vm47, %v33, 0
    %v76 = vsel %vm47, %v34, 0
    %v79 = vsel %vm47, %v35, 0
    %v82 = vsel %vm47, %v36, 0
    %v85 = vsel %vm47, %v37, 0
    %v88 = vsel %vm47, %v38, 0
    %v91 = vsel %vm47, %v39, 0
    %v94 = vsel %vm47, %v40, 0
    %96 = vmatprep.subr.mxu0 0.0
    %97 = vmatpush1.msra.mxu0 %v41
    %98 = vmatprep.subr.mxu0 0.0
    %99 = vmatpush1.msra.mxu0 %v42
    %100 = vmatprep.subr.mxu0 0.0
    %101 = vmatpush1.msra.mxu0 %v43
    %102 = vmatprep.subr.mxu0 0.0
    %103 = vmatpush1.msra.mxu0 %v44
    %104 = vmatprep.subr.mxu0 0.0
    %105 = vmatpush1.msra.mxu0 %v45
    %106 = vmatprep.subr.mxu0 0.0
    %107 = vmatpush1.msra.mxu0 %v46
    %108 = vmatprep.subr.mxu0 0.0
    %109 = vmatpush1.msra.mxu0 0.0
    %110 = vmatprep.subr.mxu0 0.0
    %111 = vmatpush1.msra.mxu0 0.0
    %112 = vmatprep.subr.mxu0 0.0
    %113 = vmatpush1.msra.mxu0 0.0
    %114 = vmatprep.subr.mxu0 0.0
    %115 = vmatpush1.msra.mxu0 0.0
    %116 = vmatprep.subr.mxu0 0.0
    %117 = vmatpush1.msra.mxu0 0.0
    %118 = vmatprep.subr.mxu0 0.0
    %119 = vmatpush1.msra.mxu0 0.0
    %120 = vmatprep.subr.mxu0 0.0
    %121 = vmatpush1.msra.mxu0 0.0
    %122 = vmatprep.subr.mxu0 0.0
    %123 = vmatpush1.msra.mxu0 0.0
    %124 = vmatprep.subr.mxu0 0.0
    %125 = vmatpush1.msra.mxu0 0.0
    %126 = vmatprep.subr.mxu0 0.0
    %127 = vmatpush1.msra.mxu0 0.0
    %128 = vmatprep.subr.mxu0 0.0
    %129 = vmatpush1.msra.mxu0 0.0
    %130 = vmatprep.subr.mxu0 0.0
    %131 = vmatpush1.msra.mxu0 0.0
    %132 = vmatprep.subr.mxu0 0.0
    %133 = vmatpush1.msra.mxu0 0.0
    %134 = vmatprep.subr.mxu0 0.0
    %135 = vmatpush1.msra.mxu0 0.0
    %136 = vmatprep.subr.mxu0 0.0
    %137 = vmatpush1.msra.mxu0 0.0
    %138 = vmatprep.subr.mxu0 0.0
    %139 = vmatpush1.msra.mxu0 0.0
    %140 = vmatprep.subr.mxu0 0.0
    %141 = vmatpush1.msra.mxu0 0.0
    %142 = vmatprep.subr.mxu0 0.0
    %143 = vmatpush1.msra.mxu0 0.0
    %144 = vmatprep.subr.mxu0 0.0
    %145 = vmatpush1.msra.mxu0 0.0
    %146 = vmatprep.subr.mxu0 0.0
    %147 = vmatpush1.msra.mxu0 0.0
    %148 = vmatprep.subr.mxu0 0.0
    %149 = vmatpush1.msra.mxu0 0.0
    %150 = vmatprep.subr.mxu0 0.0
    %151 = vmatpush1.msra.mxu0 0.0
    %152 = vmatprep.subr.mxu0 0.0
    %153 = vmatpush1.msra.mxu0 0.0
    %154 = vmatprep.subr.mxu0 0.0
    %155 = vmatpush1.msra.mxu0 0.0
    %156 = vmatprep.subr.mxu0 0.0
    %157 = vmatpush1.msra.mxu0 0.0
    %158 = vmatprep.subr.mxu0 0.0
    %159 = vmatpush1.msra.mxu0 0.0
    %160 = vmatprep.mubr.f32.mxu0 0.0
    %161 = vmatmul.mubr.f32.gmra.mrb[0].mxu0 %v49
    %v162 = vpop.f32.mrb[0].mxu0
    %v163 = vadd.f32 0.0, %v162
    %v164 = vpop.f32.mrb[0].mxu0
    %165 = vmatprep.mubr.f32.mxu0 0.0
    %166 = vmatmul.mubr.f32.gmra.mrb[0].mxu0 %v52
    %v167 = vpop.f32.mrb[0].mxu0
    %v168 = vadd.f32 0.0, %v167
    %v169 = vpop.f32.mrb[0].mxu0
    %170 = vmatprep.mubr.f32.mxu0 0.0
    %171 = vmatmul.mubr.f32.gmra.mrb[0].mxu0 %v55
    %v172 = vpop.f32.mrb[0].mxu0
    %v173 = vadd.f32 0.0, %v172
    %v174 = vpop.f32.mrb[0].mxu0
    %175 = vmatprep.mubr.f32.mxu0 0.0
    %176 = vmatmul.mubr.f32.gmra.mrb[0].mxu0 %v58
    %v177 = vpop.f32.mrb[0].mxu0
    %v178 = vadd.f32 0.0, %v177
    %v179 = vpop.f32.mrb[0].mxu0
    %180 = vmatprep.mubr.f32.mxu0 0.0
    %181 = vmatmul.mubr.f32.gmra.mrb[0].mxu0 %v61
    %v182 = vpop.f32.mrb[0].mxu0
    %v183 = vadd.f32 0.0, %v182
    %v184 = vpop.f32.mrb[0].mxu0
    %185 = vmatprep.mubr.f32.mxu0 0.0
    %186 = vmatmul.mubr.f32.gmra.mrb[0].mxu0 %v64
    %v187 = vpop.f32.mrb[0].mxu0
    %v188 = vadd.f32 0.0, %v187
    %v189 = vpop.f32.mrb[0].mxu0
    %190 = vmatprep.mubr.f32.mxu0 0.0
    %191 = vmatmul.mubr.f32.gmra.mrb[0].mxu0 %v67
    %v192 = vpop.f32.mrb[0].mxu0
    %v193 = vadd.f32 0.0, %v192
    %v194 = vpop.f32.mrb[0].mxu0
    %195 = vmatprep.mubr.f32.mxu0 0.0
    %196 = vmatmul.mubr.f32.gmra.mrb[0].mxu0 %v70
    %v197 = vpop.f32.mrb[0].mxu0
    %v198 = vadd.f32 0.0, %v197
    %v199 = vpop.f32.mrb[0].mxu0
    %200 = vmatprep.mubr.f32.mxu0 0.0
    %201 = vmatmul.mubr.f32.gmra.mrb[0].mxu0 %v73
    %v202 = vpop.f32.mrb[0].mxu0
    %v203 = vadd.f32 0.0, %v202
    %v204 = vpop.f32.mrb[0].mxu0
    %205 = vmatprep.mubr.f32.mxu0 0.0
    %206 = vmatmul.mubr.f32.gmra.mrb[0].mxu0 %v76
    %v207 = vpop.f32.mrb[0].mxu0
    %v208 = vadd.f32 0.0, %v207
    %v209 = vpop.f32.mrb[0].mxu0
    %210 = vmatprep.mubr.f32.mxu0 0.0
    %211 = vmatmul.mubr.f32.gmra.mrb[0].mxu0 %v79
    %v212 = vpop.f32.mrb[0].mxu0
    %v213 = vadd.f32 0.0, %v212
    %v214 = vpop.f32.mrb[0].mxu0
    %215 = vmatprep.mubr.f32.mxu0 0.0
    %216 = vmatmul.mubr.f32.gmra.mrb[0].mxu0 %v82
    %v217 = vpop.f32.mrb[0].mxu0
    %v218 = vadd.f32 0.0, %v217
    %v219 = vpop.f32.mrb[0].mxu0
    %220 = vmatprep.mubr.f32.mxu0 0.0
    %221 = vmatmul.mubr.f32.gmra.mrb[0].mxu0 %v85
    %v222 = vpop.f32.mrb[0].mxu0
    %v223 = vadd.f32 0.0, %v222
    %v224 = vpop.f32.mrb[0].mxu0
    %225 = vmatprep.mubr.f32.mxu0 0.0
    %226 = vmatmul.mubr.f32.gmra.mrb[0].mxu0 %v88
    %v227 = vpop.f32.mrb[0].mxu0
    %v228 = vadd.f32 0.0, %v227
    %v229 = vpop.f32.mrb[0].mxu0
    %230 = vmatprep.mubr.f32.mxu0 0.0
    %231 = vmatmul.mubr.f32.gmra.mrb[0].mxu0 %v91
    %v232 = vpop.f32.mrb[0].mxu0
    %v233 = vadd.f32 0.0, %v232
    %v234 = vpop.f32.mrb[0].mxu0
    %235 = vmatprep.mubr.f32.mxu0 0.0
    %236 = vmatmul.mubr.f32.gmra.mrb[0].mxu0 %v94
    %v237 = vpop.f32.mrb[0].mxu0
    %v238 = vadd.f32 0.0, %v237
    %v239 = vpop.f32.mrb[0].mxu0
    %240 = vdwg.mxu0
    %v241 = vld [vmem:[%s2] sm:$0xff]
    %v242 = vld [vmem:[%s2 + $0x8] sm:$0xff]
    %v243 = vld [vmem:[%s2 + $0x10] sm:$0xff]
    %v244 = vld [vmem:[%s2 + $0x18] sm:$0xff]
    %v245 = vld [vmem:[%s2 + $0x20] sm:$0xff]
    %v246 = vld [vmem:[%s2 + $0x28] sm:$0xff]
    %v247 = vld [vmem:[%s2 + $0x30] sm:$0xff]
    %v248 = vld [vmem:[%s2 + $0x38] sm:$0xff]
    %v249 = vld [vmem:[%s2 + $0x40] sm:$0xff]
    %v250 = vld [vmem:[%s2 + $0x48] sm:$0xff]
    %v251 = vld [vmem:[%s2 + $0x50] sm:$0xff]
    %v252 = vld [vmem:[%s2 + $0x58] sm:$0xff]
    %v253 = vld [vmem:[%s2 + $0x60] sm:$0xff]
    %v254 = vld [vmem:[%s2 + $0x68] sm:$0xff]
    %v255 = vld [vmem:[%s2 + $0x70] sm:$0xff]
    %v256 = vld [vmem:[%s2 + $0x78] sm:$0xff]
    %257 = vmatprep.subr.mxu0 0.0
    %258 = vmatpush1.msra.mxu0 %v241
    %259 = vmatprep.subr.mxu0 0.0
    %260 = vmatpush1.msra.mxu0 %v242
    %261 = vmatprep.subr.mxu0 0.0
    %262 = vmatpush1.msra.mxu0 %v243
    %263 = vmatprep.subr.mxu0 0.0
    %264 = vmatpush1.msra.mxu0 %v244
    %265 = vmatprep.subr.mxu0 0.0
    %266 = vmatpush1.msra.mxu0 %v245
    %267 = vmatprep.subr.mxu0 0.0
    %268 = vmatpush1.msra.mxu0 %v246
    %269 = vmatprep.subr.mxu0 0.0
    %270 = vmatpush1.msra.mxu0 %v247
    %271 = vmatprep.subr.mxu0 0.0
    %272 = vmatpush1.msra.mxu0 %v248
    %273 = vmatprep.subr.mxu0 0.0
    %274 = vmatpush1.msra.mxu0 %v249
    %275 = vmatprep.subr.mxu0 0.0
    %276 = vmatpush1.msra.mxu0 %v250
    %277 = vmatprep.subr.mxu0 0.0
    %278 = vmatpush1.msra.mxu0 %v251
    %279 = vmatprep.subr.mxu0 0.0
    %280 = vmatpush1.msra.mxu0 %v252
    %281 = vmatprep.subr.mxu0 0.0
    %282 = vmatpush1.msra.mxu0 %v253
    %283 = vmatprep.subr.mxu0 0.0
    %284 = vmatpush1.msra.mxu0 %v254
    %285 = vmatprep.subr.mxu0 0.0
    %286 = vmatpush1.msra.mxu0 %v255
    %287 = vmatprep.subr.mxu0 0.0
    %288 = vmatpush1.msra.mxu0 %v256
    %289 = vmatprep.subr.mxu0 0.0
    %290 = vmatpush1.msra.mxu0 0.0
    %291 = vmatprep.subr.mxu0 0.0
    %292 = vmatpush1.msra.mxu0 0.0
    %293 = vmatprep.subr.mxu0 0.0
    %294 = vmatpush1.msra.mxu0 0.0
    %295 = vmatprep.subr.mxu0 0.0
    %296 = vmatpush1.msra.mxu0 0.0
    %297 = vmatprep.subr.mxu0 0.0
    %298 = vmatpush1.msra.mxu0 0.0
    %299 = vmatprep.subr.mxu0 0.0
    %300 = vmatpush1.msra.mxu0 0.0
    %301 = vmatprep.subr.mxu0 0.0
    %302 = vmatpush1.msra.mxu0 0.0
    %303 = vmatprep.subr.mxu0 0.0
    %304 = vmatpush1.msra.mxu0 0.0
    %305 = vmatprep.subr.mxu0 0.0
    %306 = vmatpush1.msra.mxu0 0.0
    %307 = vmatprep.subr.mxu0 0.0
    %308 = vmatpush1.msra.mxu0 0.0
    %309 = vmatprep.subr.mxu0 0.0
    %310 = vmatpush1.msra.mxu0 0.0
    %311 = vmatprep.subr.mxu0 0.0
    %312 = vmatpush1.msra.mxu0 0.0
    %313 = vmatprep.subr.mxu0 0.0
    %314 = vmatpush1.msra.mxu0 0.0
    %315 = vmatprep.subr.mxu0 0.0
    %316 = vmatpush1.msra.mxu0 0.0
    %317 = vmatprep.subr.mxu0 0.0
    %318 = vmatpush1.msra.mxu0 0.0
    %319 = vmatprep.subr.mxu0 0.0
    %320 = vmatpush1.msra.mxu0 0.0
    %321 = vmatprep.mubr.f32.mxu0 0.0
    %322 = vmatmul.mubr.f32.gmra.mrb[0].mxu0 %v163
    %v323 = vpop.f32.mrb[0].mxu0
    %v324 = vadd.f32 0.0, %v323
    %v325 = vpop.f32.mrb[0].mxu0
    %326 = vmatprep.mubr.f32.mxu0 0.0
    %327 = vmatmul.mubr.f32.gmra.mrb[0].mxu0 %v168
    %v328 = vpop.f32.mrb[0].mxu0
    %v329 = vadd.f32 0.0, %v328
    %v330 = vpop.f32.mrb[0].mxu0
    %331 = vmatprep.mubr.f32.mxu0 0.0
    %332 = vmatmul.mubr.f32.gmra.mrb[0].mxu0 %v173
    %v333 = vpop.f32.mrb[0].mxu0
    %v334 = vadd.f32 0.0, %v333
    %v335 = vpop.f32.mrb[0].mxu0
    %336 = vmatprep.mubr.f32.mxu0 0.0
    %337 = vmatmul.mubr.f32.gmra.mrb[0].mxu0 %v178
    %v338 = vpop.f32.mrb[0].mxu0
    %v339 = vadd.f32 0.0, %v338
    %v340 = vpop.f32.mrb[0].mxu0
    %341 = vmatprep.mubr.f32.mxu0 0.0
    %342 = vmatmul.mubr.f32.gmra.mrb[0].mxu0 %v183
    %v343 = vpop.f32.mrb[0].mxu0
    %v344 = vadd.f32 0.0, %v343
    %v345 = vpop.f32.mrb[0].mxu0
    %346 = vmatprep.mubr.f32.mxu0 0.0
    %347 = vmatmul.mubr.f32.gmra.mrb[0].mxu0 %v188
    %v348 = vpop.f32.mrb[0].mxu0
    %v349 = vadd.f32 0.0, %v348
    %v350 = vpop.f32.mrb[0].mxu0
    %351 = vmatprep.mubr.f32.mxu0 0.0
    %352 = vmatmul.mubr.f32.gmra.mrb[0].mxu0 %v193
    %v353 = vpop.f32.mrb[0].mxu0
    %v354 = vadd.f32 0.0, %v353
    %v355 = vpop.f32.mrb[0].mxu0
    %356 = vmatprep.mubr.f32.mxu0 0.0
    %357 = vmatmul.mubr.f32.gmra.mrb[0].mxu0 %v198
    %v358 = vpop.f32.mrb[0].mxu0
    %v359 = vadd.f32 0.0, %v358
    %v360 = vpop.f32.mrb[0].mxu0
    %361 = vmatprep.mubr.f32.mxu0 0.0
    %362 = vmatmul.mubr.f32.gmra.mrb[0].mxu0 %v203
    %v363 = vpop.f32.mrb[0].mxu0
    %v364 = vadd.f32 0.0, %v363
    %v365 = vpop.f32.mrb[0].mxu0
    %366 = vmatprep.mubr.f32.mxu0 0.0
    %367 = vmatmul.mubr.f32.gmra.mrb[0].mxu0 %v208
    %v368 = vpop.f32.mrb[0].mxu0
    %v369 = vadd.f32 0.0, %v368
    %v370 = vpop.f32.mrb[0].mxu0
    %371 = vmatprep.mubr.f32.mxu0 0.0
    %372 = vmatmul.mubr.f32.gmra.mrb[0].mxu0 %v213
    %v373 = vpop.f32.mrb[0].mxu0
    %v374 = vadd.f32 0.0, %v373
    %v375 = vpop.f32.mrb[0].mxu0
    %376 = vmatprep.mubr.f32.mxu0 0.0
    %377 = vmatmul.mubr.f32.gmra.mrb[0].mxu0 %v218
    %v378 = vpop.f32.mrb[0].mxu0
    %v379 = vadd.f32 0.0, %v378
    %v380 = vpop.f32.mrb[0].mxu0
    %381 = vmatprep.mubr.f32.mxu0 0.0
    %382 = vmatmul.mubr.f32.gmra.mrb[0].mxu0 %v223
    %v383 = vpop.f32.mrb[0].mxu0
    %v384 = vadd.f32 0.0, %v383
    %v385 = vpop.f32.mrb[0].mxu0
    %386 = vmatprep.mubr.f32.mxu0 0.0
    %387 = vmatmul.mubr.f32.gmra.mrb[0].mxu0 %v228
    %v388 = vpop.f32.mrb[0].mxu0
    %v389 = vadd.f32 0.0, %v388
    %v390 = vpop.f32.mrb[0].mxu0
    %391 = vmatprep.mubr.f32.mxu0 0.0
    %392 = vmatmul.mubr.f32.gmra.mrb[0].mxu0 %v233
    %v393 = vpop.f32.mrb[0].mxu0
    %v394 = vadd.f32 0.0, %v393
    %v395 = vpop.f32.mrb[0].mxu0
    %396 = vmatprep.mubr.f32.mxu0 0.0
    %397 = vmatmul.mubr.f32.gmra.mrb[0].mxu0 %v238
    %v398 = vpop.f32.mrb[0].mxu0
    %v399 = vadd.f32 0.0, %v398
    %v400 = vpop.f32.mrb[0].mxu0
    %401 = vdwg.mxu0
    %v402 = vld [vmem:[%s3] sm:$0xff]
    %v403 = vld [vmem:[%s3 + $0x8] sm:$0xff]
    %404 = vmatprep.subr.mxu0 0.0
    %405 = vmatpush1.msra.mxu0 %v324
    %406 = vmatprep.subr.mxu0 0.0
    %407 = vmatpush1.msra.mxu0 %v329
    %408 = vmatprep.subr.mxu0 0.0
    %409 = vmatpush1.msra.mxu0 %v334
    %410 = vmatprep.subr.mxu0 0.0
    %411 = vmatpush1.msra.mxu0 %v339
    %412 = vmatprep.subr.mxu0 0.0
    %413 = vmatpush1.msra.mxu0 %v344
    %414 = vmatprep.subr.mxu0 0.0
    %415 = vmatpush1.msra.mxu0 %v349
    %416 = vmatprep.subr.mxu0 0.0
    %417 = vmatpush1.msra.mxu0 %v354
    %418 = vmatprep.subr.mxu0 0.0
    %419 = vmatpush1.msra.mxu0 %v359
    %420 = vmatprep.subr.mxu0 0.0
    %421 = vmatpush1.msra.mxu0 %v364
    %422 = vmatprep.subr.mxu0 0.0
    %423 = vmatpush1.msra.mxu0 %v369
    %424 = vmatprep.subr.mxu0 0.0
    %425 = vmatpush1.msra.mxu0 %v374
    %426 = vmatprep.subr.mxu0 0.0
    %427 = vmatpush1.msra.mxu0 %v379
    %428 = vmatprep.subr.mxu0 0.0
    %429 = vmatpush1.msra.mxu0 %v384
    %430 = vmatprep.subr.mxu0 0.0
    %431 = vmatpush1.msra.mxu0 %v389
    %432 = vmatprep.subr.mxu0 0.0
    %433 = vmatpush1.msra.mxu0 %v394
    %434 = vmatprep.subr.mxu0 0.0
    %435 = vmatpush1.msra.mxu0 %v399
    %436 = vmatprep.subr.mxu0 0.0
    %437 = vmatpush1.msra.mxu0 0.0
    %438 = vmatprep.subr.mxu0 0.0
    %439 = vmatpush1.msra.mxu0 0.0
    %440 = vmatprep.subr.mxu0 0.0
    %441 = vmatpush1.msra.mxu0 0.0
    %442 = vmatprep.subr.mxu0 0.0
    %443 = vmatpush1.msra.mxu0 0.0
    %444 = vmatprep.subr.mxu0 0.0
    %445 = vmatpush1.msra.mxu0 0.0
    %446 = vmatprep.subr.mxu0 0.0
    %447 = vmatpush1.msra.mxu0 0.0
    %448 = vmatprep.subr.mxu0 0.0
    %449 = vmatpush1.msra.mxu0 0.0
    %450 = vmatprep.subr.mxu0 0.0
    %451 = vmatpush1.msra.mxu0 0.0
    %452 = vmatprep.subr.mxu0 0.0
    %453 = vmatpush1.msra.mxu0 0.0
    %454 = vmatprep.subr.mxu0 0.0
    %455 = vmatpush1.msra.mxu0 0.0
    %456 = vmatprep.subr.mxu0 0.0
    %457 = vmatpush1.msra.mxu0 0.0
    %458 = vmatprep.subr.mxu0 0.0
    %459 = vmatpush1.msra.mxu0 0.0
    %460 = vmatprep.subr.mxu0 0.0
    %461 = vmatpush1.msra.mxu0 0.0
    %462 = vmatprep.subr.mxu0 0.0
    %463 = vmatpush1.msra.mxu0 0.0
    %464 = vmatprep.subr.mxu0 0.0
    %465 = vmatpush1.msra.mxu0 0.0
    %466 = vmatprep.subr.mxu0 0.0
    %467 = vmatpush1.msra.mxu0 0.0
    %468 = vmatprep.mubr.f32.mxu0 0.0
    %469 = vmatmul.mubr.f32.gmra.mrb[0].mxu0 %v402
    %v470 = vpop.f32.mrb[0].mxu0
    %v471 = vadd.f32 0.0, %v470
    %v472 = vpop.f32.mrb[0].mxu0
    %473 = vmatprep.mubr.f32.mxu0 0.0
    %474 = vmatmul.mubr.f32.gmra.mrb[0].mxu0 %v403
    %v475 = vpop.f32.mrb[0].mxu0
    %v476 = vadd.f32 0.0, %v475
    %v477 = vpop.f32.mrb[0].mxu0
    %478 = vdwg.mxu0
    %v479 = vmax.f32 %v471, 0.0
    %v480 = vmax.f32 %v476, 0.0
    %481 = vmatprep.subr.mxu0 0.0
    %482 = vmatpush1.msra.mxu0 %v241
    %483 = vmatprep.subr.mxu0 0.0
    %484 = vmatpush1.msra.mxu0 %v242
    %485 = vmatprep.subr.mxu0 0.0
    %486 = vmatpush1.msra.mxu0 %v243
    %487 = vmatprep.subr.mxu0 0.0
    %488 = vmatpush1.msra.mxu0 %v244
    %489 = vmatprep.subr.mxu0 0.0
    %490 = vmatpush1.msra.mxu0 %v245
    %491 = vmatprep.subr.mxu0 0.0
    %492 = vmatpush1.msra.mxu0 %v246
    %493 = vmatprep.subr.mxu0 0.0
    %494 = vmatpush1.msra.mxu0 %v247
    %495 = vmatprep.subr.mxu0 0.0
    %496 = vmatpush1.msra.mxu0 %v248
    %497 = vmatprep.subr.mxu0 0.0
    %498 = vmatpush1.msra.mxu0 %v249
    %499 = vmatprep.subr.mxu0 0.0
    %500 = vmatpush1.msra.mxu0 %v250
    %501 = vmatprep.subr.mxu0 0.0
    %502 = vmatpush1.msra.mxu0 %v251
    %503 = vmatprep.subr.mxu0 0.0
    %504 = vmatpush1.msra.mxu0 %v252
    %505 = vmatprep.subr.mxu0 0.0
    %506 = vmatpush1.msra.mxu0 %v253
    %507 = vmatprep.subr.mxu0 0.0
    %508 = vmatpush1.msra.mxu0 %v254
    %509 = vmatprep.subr.mxu0 0.0
    %510 = vmatpush1.msra.mxu0 %v255
    %511 = vmatprep.subr.mxu0 0.0
    %512 = vmatpush1.msra.mxu0 %v256
    %513 = vmatprep.subr.mxu0 0.0
    %514 = vmatpush1.msra.mxu0 0.0
    %515 = vmatprep.subr.mxu0 0.0
    %516 = vmatpush1.msra.mxu0 0.0
    %517 = vmatprep.subr.mxu0 0.0
    %518 = vmatpush1.msra.mxu0 0.0
    %519 = vmatprep.subr.mxu0 0.0
    %520 = vmatpush1.msra.mxu0 0.0
    %521 = vmatprep.subr.mxu0 0.0
    %522 = vmatpush1.msra.mxu0 0.0
    %523 = vmatprep.subr.mxu0 0.0
    %524 = vmatpush1.msra.mxu0 0.0
    %525 = vmatprep.subr.mxu0 0.0
    %526 = vmatpush1.msra.mxu0 0.0
    %527 = vmatprep.subr.mxu0 0.0
    %528 = vmatpush1.msra.mxu0 0.0
    %529 = vmatprep.subr.mxu0 0.0
    %530 = vmatpush1.msra.mxu0 0.0
    %531 = vmatprep.subr.mxu0 0.0
    %532 = vmatpush1.msra.mxu0 0.0
    %533 = vmatprep.subr.mxu0 0.0
    %534 = vmatpush1.msra.mxu0 0.0
    %535 = vmatprep.subr.mxu0 0.0
    %536 = vmatpush1.msra.mxu0 0.0
    %537 = vmatprep.subr.mxu0 0.0
    %538 = vmatpush1.msra.mxu0 0.0
    %539 = vmatprep.subr.mxu0 0.0
    %540 = vmatpush1.msra.mxu0 0.0
    %541 = vmatprep.subr.mxu0 0.0
    %542 = vmatpush1.msra.mxu0 0.0
    %543 = vmatprep.subr.mxu0 0.0
    %544 = vmatpush1.msra.mxu0 0.0
    %545 = vmatprep.mubr.f32.mxu0 0.0
    %546 = vmatmul.mubr.f32.gmra.mrb[0].mxu0 %v479
    %v547 = vpop.f32.mrb[0].mxu0
    %v548 = vadd.f32 0.0, %v547
    %v549 = vpop.f32.mrb[0].mxu0
    %550 = vmatprep.mubr.f32.mxu0 0.0
    %551 = vmatmul.mubr.f32.gmra.mrb[0].mxu0 %v480
    %v552 = vpop.f32.mrb[0].mxu0
    %v553 = vadd.f32 0.0, %v552
    %v554 = vpop.f32.mrb[0].mxu0
    %555 = vdwg.mxu0
    %v556 = vld [vmem:[%s4] sm:$0xff]
    %v557 = vld [vmem:[%s4 + $0x8] sm:$0xff]
    %v558 = vld [vmem:[%s4 + $0x10] sm:$0xff]
    %v559 = vld [vmem:[%s4 + $0x18] sm:$0xff]
    %v560 = vld [vmem:[%s4 + $0x20] sm:$0xff]
    %v561 = vld [vmem:[%s4 + $0x28] sm:$0xff]
    %v562 = vld [vmem:[%s4 + $0x30] sm:$0xff]
    %v563 = vld [vmem:[%s4 + $0x38] sm:$0xff]
    %v564 = vld [vmem:[%s4 + $0x40] sm:$0xff]
    %v565 = vld [vmem:[%s4 + $0x48] sm:$0xff]
    %v566 = vld [vmem:[%s4 + $0x50] sm:$0xff]
    %v567 = vld [vmem:[%s4 + $0x58] sm:$0xff]
    %v568 = vld [vmem:[%s4 + $0x60] sm:$0xff]
    %v569 = vld [vmem:[%s4 + $0x68] sm:$0xff]
    %v570 = vld [vmem:[%s4 + $0x70] sm:$0xff]
    %v571 = vld [vmem:[%s4 + $0x78] sm:$0xff]
    %vm572 = vcmask 130048
    %v574 = vsel %vm572, %v556, 0
    %v577 = vsel %vm572, %v557, 0
    %v580 = vsel %vm572, %v558, 0
    %v583 = vsel %vm572, %v559, 0
    %v586 = vsel %vm572, %v560, 0
    %v589 = vsel %vm572, %v561, 0
    %v592 = vsel %vm572, %v562, 0
    %v595 = vsel %vm572, %v563, 0
    %v598 = vsel %vm572, %v564, 0
    %v601 = vsel %vm572, %v565, 0
    %v604 = vsel %vm572, %v566, 0
    %v607 = vsel %vm572, %v567, 0
    %v610 = vsel %vm572, %v568, 0
    %v613 = vsel %vm572, %v569, 0
    %v616 = vsel %vm572, %v570, 0
    %v619 = vsel %vm572, %v571, 0
    %621 = vmatprep.subr.mxu0 0.0
    %622 = vmatpush1.msra.mxu0 %v548
    %623 = vmatprep.subr.mxu0 0.0
    %624 = vmatpush1.msra.mxu0 %v553
    %625 = vmatprep.subr.mxu0 0.0
    %626 = vmatpush1.msra.mxu0 0.0
    %627 = vmatprep.subr.mxu0 0.0
    %628 = vmatpush1.msra.mxu0 0.0
    %629 = vmatprep.subr.mxu0 0.0
    %630 = vmatpush1.msra.mxu0 0.0
    %631 = vmatprep.subr.mxu0 0.0
    %632 = vmatpush1.msra.mxu0 0.0
    %633 = vmatprep.subr.mxu0 0.0
    %634 = vmatpush1.msra.mxu0 0.0
    %635 = vmatprep.subr.mxu0 0.0
    %636 = vmatpush1.msra.mxu0 0.0
    %637 = vmatprep.subr.mxu0 0.0
    %638 = vmatpush1.msra.mxu0 0.0
    %639 = vmatprep.subr.mxu0 0.0
    %640 = vmatpush1.msra.mxu0 0.0
    %641 = vmatprep.subr.mxu0 0.0
    %642 = vmatpush1.msra.mxu0 0.0
    %643 = vmatprep.subr.mxu0 0.0
    %644 = vmatpush1.msra.mxu0 0.0
    %645 = vmatprep.subr.mxu0 0.0
    %646 = vmatpush1.msra.mxu0 0.0
    %647 = vmatprep.subr.mxu0 0.0
    %648 = vmatpush1.msra.mxu0 0.0
    %649 = vmatprep.subr.mxu0 0.0
    %650 = vmatpush1.msra.mxu0 0.0
    %651 = vmatprep.subr.mxu0 0.0
    %652 = vmatpush1.msra.mxu0 0.0
    %653 = vmatprep.subr.mxu0 0.0
    %654 = vmatpush1.msra.mxu0 0.0
    %655 = vmatprep.subr.mxu0 0.0
    %656 = vmatpush1.msra.mxu0 0.0
    %657 = vmatprep.subr.mxu0 0.0
    %658 = vmatpush1.msra.mxu0 0.0
    %659 = vmatprep.subr.mxu0 0.0
    %660 = vmatpush1.msra.mxu0 0.0
    %661 = vmatprep.subr.mxu0 0.0
    %662 = vmatpush1.msra.mxu0 0.0
    %663 = vmatprep.subr.mxu0 0.0
    %664 = vmatpush1.msra.mxu0 0.0
    %665 = vmatprep.subr.mxu0 0.0
    %666 = vmatpush1.msra.mxu0 0.0
    %667 = vmatprep.subr.mxu0 0.0
    %668 = vmatpush1.msra.mxu0 0.0
    %669 = vmatprep.subr.mxu0 0.0
    %670 = vmatpush1.msra.mxu0 0.0
    %671 = vmatprep.subr.mxu0 0.0
    %672 = vmatpush1.msra.mxu0 0.0
    %673 = vmatprep.subr.mxu0 0.0
    %674 = vmatpush1.msra.mxu0 0.0
    %675 = vmatprep.subr.mxu0 0.0
    %676 = vmatpush1.msra.mxu0 0.0
    %677 = vmatprep.subr.mxu0 0.0
    %678 = vmatpush1.msra.mxu0 0.0
    %679 = vmatprep.subr.mxu0 0.0
    %680 = vmatpush1.msra.mxu0 0.0
    %681 = vmatprep.subr.mxu0 0.0
    %682 = vmatpush1.msra.mxu0 0.0
    %683 = vmatprep.subr.mxu0 0.0
    %684 = vmatpush1.msra.mxu0 0.0
    %685 = vmatprep.mubr.f32.mxu0 0.0
    %686 = vmatmul.mubr.f32.gmra.mrb[0].mxu0 %v574
    %v687 = vpop.f32.mrb[0].mxu0
    %v688 = vadd.f32 %v163, %v687
    %v689 = vpop.f32.mrb[0].mxu0
    %690 = vmatprep.mubr.f32.mxu0 0.0
    %691 = vmatmul.mubr.f32.gmra.mrb[0].mxu0 %v577
    %v692 = vpop.f32.mrb[0].mxu0
    %v693 = vadd.f32 %v168, %v692
    %v694 = vpop.f32.mrb[0].mxu0
    %695 = vmatprep.mubr.f32.mxu0 0.0
    %696 = vmatmul.mubr.f32.gmra.mrb[0].mxu0 %v580
    %v697 = vpop.f32.mrb[0].mxu0
    %v698 = vadd.f32 %v173, %v697
    %v699 = vpop.f32.mrb[0].mxu0
    %700 = vmatprep.mubr.f32.mxu0 0.0
    %701 = vmatmul.mubr.f32.gmra.mrb[0].mxu0 %v583
    %v702 = vpop.f32.mrb[0].mxu0
    %v703 = vadd.f32 %v178, %v702
    %v704 = vpop.f32.mrb[0].mxu0
    %705 = vmatprep.mubr.f32.mxu0 0.0
    %706 = vmatmul.mubr.f32.gmra.mrb[0].mxu0 %v586
    %v707 = vpop.f32.mrb[0].mxu0
    %v708 = vadd.f32 %v183, %v707
    %v709 = vpop.f32.mrb[0].mxu0
    %710 = vmatprep.mubr.f32.mxu0 0.0
    %711 = vmatmul.mubr.f32.gmra.mrb[0].mxu0 %v589
    %v712 = vpop.f32.mrb[0].mxu0
    %v713 = vadd.f32 %v188, %v712
    %v714 = vpop.f32.mrb[0].mxu0
    %715 = vmatprep.mubr.f32.mxu0 0.0
    %716 = vmatmul.mubr.f32.gmra.mrb[0].mxu0 %v592
    %v717 = vpop.f32.mrb[0].mxu0
    %v718 = vadd.f32 %v193, %v717
    %v719 = vpop.f32.mrb[0].mxu0
    %720 = vmatprep.mubr.f32.mxu0 0.0
    %721 = vmatmul.mubr.f32.gmra.mrb[0].mxu0 %v595
    %v722 = vpop.f32.mrb[0].mxu0
    %v723 = vadd.f32 %v198, %v722
    %v724 = vpop.f32.mrb[0].mxu0
    %725 = vmatprep.mubr.f32.mxu0 0.0
    %726 = vmatmul.mubr.f32.gmra.mrb[0].mxu0 %v598
    %v727 = vpop.f32.mrb[0].mxu0
    %v728 = vadd.f32 %v203, %v727
    %v729 = vpop.f32.mrb[0].mxu0
    %730 = vmatprep.mubr.f32.mxu0 0.0
    %731 = vmatmul.mubr.f32.gmra.mrb[0].mxu0 %v601
    %v732 = vpop.f32.mrb[0].mxu0
    %v733 = vadd.f32 %v208, %v732
    %v734 = vpop.f32.mrb[0].mxu0
    %735 = vmatprep.mubr.f32.mxu0 0.0
    %736 = vmatmul.mubr.f32.gmra.mrb[0].mxu0 %v604
    %v737 = vpop.f32.mrb[0].mxu0
    %v738 = vadd.f32 %v213, %v737
    %v739 = vpop.f32.mrb[0].mxu0
    %740 = vmatprep.mubr.f32.mxu0 0.0
    %741 = vmatmul.mubr.f32.gmra.mrb[0].mxu0 %v607
    %v742 = vpop.f32.mrb[0].mxu0
    %v743 = vadd.f32 %v218, %v742
    %v744 = vpop.f32.mrb[0].mxu0
    %745 = vmatprep.mubr.f32.mxu0 0.0
    %746 = vmatmul.mubr.f32.gmra.mrb[0].mxu0 %v610
    %v747 = vpop.f32.mrb[0].mxu0
    %v748 = vadd.f32 %v223, %v747
    %v749 = vpop.f32.mrb[0].mxu0
    %750 = vmatprep.mubr.f32.mxu0 0.0
    %751 = vmatmul.mubr.f32.gmra.mrb[0].mxu0 %v613
    %v752 = vpop.f32.mrb[0].mxu0
    %v753 = vadd.f32 %v228, %v752
    %v754 = vpop.f32.mrb[0].mxu0
    %755 = vmatprep.mubr.f32.mxu0 0.0
    %756 = vmatmul.mubr.f32.gmra.mrb[0].mxu0 %v616
    %v757 = vpop.f32.mrb[0].mxu0
    %v758 = vadd.f32 %v233, %v757
    %v759 = vpop.f32.mrb[0].mxu0
    %760 = vmatprep.mubr.f32.mxu0 0.0
    %761 = vmatmul.mubr.f32.gmra.mrb[0].mxu0 %v619
    %v762 = vpop.f32.mrb[0].mxu0
    %v763 = vadd.f32 %v238, %v762
    %v764 = vpop.f32.mrb[0].mxu0
    %765 = vdwg.mxu0
    %v766 = vmul.f32 %v688, %v688
    %v767 = vmul.f32 %v693, %v693
    %v768 = vmul.f32 %v698, %v698
    %v769 = vmul.f32 %v703, %v703
    %v770 = vmul.f32 %v708, %v708
    %v771 = vmul.f32 %v713, %v713
    %v772 = vmul.f32 %v718, %v718
    %v773 = vmul.f32 %v723, %v723
    %v774 = vmul.f32 %v728, %v728
    %v775 = vmul.f32 %v733, %v733
    %v776 = vmul.f32 %v738, %v738
    %v777 = vmul.f32 %v743, %v743
    %v778 = vmul.f32 %v748, %v748
    %v779 = vmul.f32 %v753, %v753
    %v780 = vmul.f32 %v758, %v758
    %v781 = vmul.f32 %v763, %v763
    %v782 = vadd.f32 %v766, %v767
    %v783 = vadd.f32 %v782, %v768
    %v784 = vadd.f32 %v783, %v769
    %v785 = vadd.f32 %v784, %v770
    %v786 = vadd.f32 %v785, %v771
    %v787 = vadd.f32 %v786, %v772
    %v788 = vadd.f32 %v787, %v773
    %v789 = vadd.f32 %v788, %v774
    %v790 = vadd.f32 %v789, %v775
    %v791 = vadd.f32 %v790, %v776
    %v792 = vadd.f32 %v791, %v777
    %v793 = vadd.f32 %v792, %v778
    %v794 = vadd.f32 %v793, %v779
    %v795 = vadd.f32 %v794, %v780
    %v796 = vadd.f32 %v795, %v781
    %v797 = vrot.slane %v796, 4
    %v798 = vadd.f32 %v796, %v797
    %v799 = vrot.slane %v798, 2
    %v800 = vadd.f32 %v798, %v799
    %v801 = vrot.slane %v800, 1
    %v802 = vadd.f32 %v800, %v801
    %v803 = vmax.f32 %v802, 1e-30
    %v804 = vrsqrt.pop %v803
    %v805 = vmul.f32 %v688, %v804
    %v806 = vmul.f32 %v693, %v804
    %v807 = vmul.f32 %v698, %v804
    %v808 = vmul.f32 %v703, %v804
    %v809 = vmul.f32 %v708, %v804
    %v810 = vmul.f32 %v713, %v804
    %v811 = vmul.f32 %v718, %v804
    %v812 = vmul.f32 %v723, %v804
    %v813 = vmul.f32 %v728, %v804
    %v814 = vmul.f32 %v733, %v804
    %v815 = vmul.f32 %v738, %v804
    %v816 = vmul.f32 %v743, %v804
    %v817 = vmul.f32 %v748, %v804
    %v818 = vmul.f32 %v753, %v804
    %v819 = vmul.f32 %v758, %v804
    %v820 = vmul.f32 %v763, %v804
    %s821 = sld [smem:[#allocation2]]
    %v822 = vstv %s821
    %v823 = vmul.f32 %v805, %v822
    %v824 = vmul.f32 %v806, %v822
    %v825 = vmul.f32 %v807, %v822
    %v826 = vmul.f32 %v808, %v822
    %v827 = vmul.f32 %v809, %v822
    %v828 = vmul.f32 %v810, %v822
    %v829 = vmul.f32 %v811, %v822
    %v830 = vmul.f32 %v812, %v822
    %v831 = vmul.f32 %v813, %v822
    %v832 = vmul.f32 %v814, %v822
    %v833 = vmul.f32 %v815, %v822
    %v834 = vmul.f32 %v816, %v822
    %v835 = vmul.f32 %v817, %v822
    %v836 = vmul.f32 %v818, %v822
    %v837 = vmul.f32 %v819, %v822
    %v838 = vmul.f32 %v820, %v822
    %v839 = vpack.c.bf16 %v824, %v823
    %v840 = vpack.c.bf16 %v826, %v825
    %v841 = vpack.c.bf16 %v828, %v827
    %v842 = vpack.c.bf16 %v830, %v829
    %v843 = vpack.c.bf16 %v832, %v831
    %v844 = vpack.c.bf16 %v834, %v833
    %v845 = vpack.c.bf16 %v836, %v835
    %v846 = vpack.c.bf16 %v838, %v837
    %v855 = vunpack.c.l.b16 %v839
    %v856 = vunpack.c.h.b16 %v839
    %v857 = vunpack.c.l.b16 %v840
    %v858 = vunpack.c.h.b16 %v840
    %v859 = vunpack.c.l.b16 %v841
    %v860 = vunpack.c.h.b16 %v841
    %v861 = vunpack.c.l.b16 %v842
    %v862 = vunpack.c.h.b16 %v842
    %v863 = vunpack.c.l.b16 %v843
    %v864 = vunpack.c.h.b16 %v843
    %v865 = vunpack.c.l.b16 %v844
    %v866 = vunpack.c.h.b16 %v844
    %v867 = vunpack.c.l.b16 %v845
    %v868 = vunpack.c.h.b16 %v845
    %v869 = vunpack.c.l.b16 %v846
    %v870 = vunpack.c.h.b16 %v846
    %v871 = vpack.c.b16 %v855, %v855
    %v872 = vpack.c.b16 %v856, %v856
    %v873 = vpack.c.b16 %v857, %v857
    %v874 = vpack.c.b16 %v858, %v858
    %v875 = vpack.c.b16 %v859, %v859
    %v876 = vpack.c.b16 %v860, %v860
    %v877 = vpack.c.b16 %v861, %v861
    %v878 = vpack.c.b16 %v862, %v862
    %v879 = vpack.c.b16 %v863, %v863
    %v880 = vpack.c.b16 %v864, %v864
    %v881 = vpack.c.b16 %v865, %v865
    %v882 = vpack.c.b16 %v866, %v866
    %v883 = vpack.c.b16 %v867, %v867
    %v884 = vpack.c.b16 %v868, %v868
    %v885 = vpack.c.b16 %v869, %v869
    %v886 = vpack.c.b16 %v870, %v870
    %903 = vst [vmem:[#allocation3] sm:$0xf] %v871
    %904 = vst [vmem:[#allocation3 + $0x4] sm:$0xf] %v872
    %905 = vst [vmem:[#allocation3 + $0x8] sm:$0xf] %v873
    %906 = vst [vmem:[#allocation3 + $0xc] sm:$0xf] %v874
    %907 = vst [vmem:[#allocation3 + $0x10] sm:$0xf] %v875
    %908 = vst [vmem:[#allocation3 + $0x14] sm:$0xf] %v876
    %909 = vst [vmem:[#allocation3 + $0x18] sm:$0xf] %v877
    %910 = vst [vmem:[#allocation3 + $0x1c] sm:$0xf] %v878
    %911 = vst [vmem:[#allocation3 + $0x20] sm:$0xf] %v879
    %912 = vst [vmem:[#allocation3 + $0x24] sm:$0xf] %v880
    %913 = vst [vmem:[#allocation3 + $0x28] sm:$0xf] %v881
    %914 = vst [vmem:[#allocation3 + $0x2c] sm:$0xf] %v882
    %915 = vst [vmem:[#allocation3 + $0x30] sm:$0xf] %v883
    %916 = vst [vmem:[#allocation3 + $0x34] sm:$0xf] %v884
    %917 = vst [vmem:[#allocation3 + $0x38] sm:$0xf] %v885
    %918 = vst [vmem:[#allocation3 + $0x3c] sm:$0xf] %v886
    // Predicated region
    $region26: #{tpu_custom_call.1} parent=1 // pred_check
      _
    $region27: #{tpu_custom_call.1} parent=1 // pred_check_branch
      %920 = sbr.rel (0) target = $region29
    $region28: #{tpu_custom_call.1} parent=1 // pred_region
      %s922 = ssub.s32 1024, 1024
      %923 = vsyncadd [#allocation4], %s922
      %s924 = sshll.u32 [#allocation3], 4
      %s925 = int_to_ptr.vmem [resolvable:$true] %s924
      %930 = dma.vmem_to_hbm [thread:$0]  %s925, 1024, %s6, [#allocation4], 64, 64, 4
    $region29: #{tpu_custom_call.1} parent=1 // pred_fallthru
      _
    // Predicated region
    $region30: #{tpu_custom_call.1} parent=1 // pred_check
      _
    $region31: #{tpu_custom_call.1} parent=1 // pred_check_branch
      %932 = sbr.rel (0) target = $region33
    $region32: #{tpu_custom_call.1} parent=1 // pred_region
      %933 = dma.done [#allocation4], 1024
    $region33: #{tpu_custom_call.1} parent=1 // pred_fallthru
      _
    %934 = vsyncpa [#allocation4], 1

</llo_original>
